<compile_context>
chip_gen: v7x
topology: tpu7x:2x2x1
jax: 0.10.0
libtpu: 0.0.40
codegen_flags: <defaults>
</compile_context>

<pallas_src>
import jax
import jax.numpy as jnp
from jax.experimental import pallas as pl
from jax.experimental.pallas import tpu as pltpu


GROUP = 8                 # x-rows packed per reshaped row (lane-dense layout)
FEAT = 16                 # columns of x: [p | 15 linear features]
K_DIM = GROUP * FEAT      # 128 -> one full lane tile on the matmul K axis
N_COLS = 3 * GROUP        # 24  -> matmul output: b | a | p, lane-grouped
OUT_COLS = 2 * GROUP      # 16  -> packed kernel output: r | out


def _hack_kernel(x_ref, w_ref, o_ref):
    x = x_ref[...]            # (BR, 128) f32 -- 8 x-rows per vreg row, fully lane dense
    w = w_ref[...]            # (128, 24) block-diagonal fused weight (VMEM-resident)

    # One MXU matmul produces, lane-grouped, b (lanes 0:8), a (8:16), p (16:24)
    # for the 8 x-rows packed in each reshaped row.
    abp = jnp.dot(x, w, preferred_element_type=jnp.float32)      # (BR, 24)
    b = abp[:, 0:GROUP]
    a = abp[:, GROUP:2 * GROUP]
    p = abp[:, 2 * GROUP:3 * GROUP]

    out = b + a * p

    # 1/a on the EUP slot (free) + one Newton refinement -> ~f32 accuracy
    # without the multi-op VALU exact-divide sequence.
    inv_a = pl.reciprocal(a, approx=True)
    inv_a = inv_a * (2.0 - a * inv_a)
    # (p_opt*a + b)*p_opt with p_opt = -b/(2a)  ==  -b^2/(4a)
    r = (-0.25) * (b * b) * inv_a

    # Packed, lane-grouped output block: r in lanes 0:8, out in lanes 8:16.
    # Two disjoint lane-range stores into the same block -> one writeback DMA
    # stream per tile; the masked-store cost is negligible after the 8x
    # density restructure.
    o_ref[:, 0:GROUP] = r
    o_ref[:, GROUP:OUT_COLS] = out


def _round_up(n, m):
    return ((n + m - 1) // m) * m


def _fused_weight(w1, w2):
    """Block-diagonal (128, 24) weight.

    Per 16-lane group g (one x-row): columns [g | 8+g | 16+g] hold
    [0; w1], [0; w2] and the one-hot that extracts p = x[:, 0].
    """
    w1c = jnp.concatenate(
        [jnp.zeros((1, 1), jnp.float32), w1.astype(jnp.float32)], axis=0)   # (16, 1)
    w2c = jnp.concatenate(
        [jnp.zeros((1, 1), jnp.float32), w2.astype(jnp.float32)], axis=0)   # (16, 1)
    pc = jnp.zeros((FEAT, 1), jnp.float32).at[0, 0].set(1.0)                # (16, 1)
    eye = jnp.eye(GROUP, dtype=jnp.float32)
    wb = jnp.kron(eye, w1c)                                                 # (128, 8)
    wa = jnp.kron(eye, w2c)                                                 # (128, 8)
    wp = jnp.kron(eye, pc)                                                  # (128, 8)
    return jnp.concatenate([wb, wa, wp], axis=1)                            # (128, 24)


def hack_forward(x, w1, w2, *, tile_rows=None):
    """x: (N, 16) f32; w1, w2: (15, 1) f32 (transposed nn.Linear weights).

    Returns (r, out), each (N, 1) f32, matching Hack.forward(x) == (r, x).
    """
    N, F = x.shape
    assert F == FEAT, "expected 16 input columns (p + 15 linear features)"

    # Free, row-major reshape to the lane-dense layout.  Only when N is not a
    # multiple of 8 do we pad (<8 rows); padded rows produce NaN r but are
    # sliced off below and never reach the caller.
    n_pad = _round_up(N, GROUP)
    if n_pad != N:
        x = jnp.pad(x, ((0, n_pad - N), (0, 0)))
    rows = n_pad // GROUP
    xr = jnp.reshape(x, (rows, K_DIM))        # (rows, 128): 8 consecutive x-rows per row

    w = _fused_weight(w1, w2)                 # (128, 24)

    if tile_rows is None:
        # 4096 reshaped rows = 32K x-rows = 2 MiB input block on big batches;
        # shrink on small batches so the grid keeps >= ~8 "parallel" steps
        # (v7x megacore load balance).
        tile_rows = min(4096, max(8, _round_up(pl.cdiv(rows, 8), 8)))
    tile_rows = max(8, _round_up(int(tile_rows), 8))
    tile_rows = min(tile_rows, _round_up(rows, 8))

    # Ragged last block handled by Pallas (no physical padding of x).
    grid = (pl.cdiv(rows, tile_rows),)

    packed = pl.pallas_call(
        _hack_kernel,
        out_shape=jax.ShapeDtypeStruct((rows, OUT_COLS), jnp.float32),
        grid=grid,
        in_specs=[
            pl.BlockSpec((tile_rows, K_DIM), lambda i: (i, 0)),
            # Constant index map: the tiny fused weight stays VMEM-resident,
            # no per-tile re-staging.
            pl.BlockSpec((K_DIM, N_COLS), lambda i: (0, 0)),
        ],
        out_specs=pl.BlockSpec((tile_rows, OUT_COLS), lambda i: (i, 0)),
        compiler_params=pltpu.CompilerParams(
            dimension_semantics=("parallel",),      # megacore sharding on v7x
            vmem_limit_bytes=32 * 1024 * 1024,      # safe on v5e/v6e/v7x
        ),
    )(xr, w)

    # Lane-grouped packing makes these contiguous, cheap slices+reshapes.
    r = packed[:, 0:GROUP].reshape(n_pad, 1)[:N]
    out = packed[:, GROUP:OUT_COLS].reshape(n_pad, 1)[:N]
    return r, out


def hack_reference(x, w1, w2):
    """Pure-JAX reference (f32 sum-products, no MXU precision ambiguity)."""
    p = x[:, 0:1]
    xx = x[:, 1:]
    a = jnp.sum(xx * w2.T, axis=1, keepdims=True)
    b = jnp.sum(xx * w1.T, axis=1, keepdims=True)
    out = b + a * p
    p_opt = -b / (2.0 * a)
    r = (p_opt * a + b) * p_opt
    return r, out


if __name__ == "__main__":
    key = jax.random.PRNGKey(0)
    k1, k2, k3 = jax.random.split(key, 3)

    # nn.Linear(15, 1, bias=False) weights, stored transposed as (15, 1).
    w1 = jax.random.normal(k1, (15, 1), dtype=jnp.float32) * 0.1
    # Keep a = xx @ w2 bounded away from 0 (mirrors the source data: positive
    # features, intercept column) so r = -b^2/(4a) is well conditioned.
    w2 = jax.random.uniform(k2, (15, 1), dtype=jnp.float32, minval=0.05, maxval=0.15)

    fwd = jax.jit(hack_forward)

    def make_x(k, n):
        kp, kf = jax.random.split(k)
        p = jax.random.normal(kp, (n, 1), dtype=jnp.float32)
        feats = 1.0 + 0.45 * jax.random.normal(kf, (n, 15), dtype=jnp.float32)
        return jnp.concatenate([p, feats], axis=1)

    ok = True
    # 128  : single grid block
    # 3000 : multi-step grid with a ragged last block (no physical padding)
    # 1001 : N % 8 != 0 -> tiny pad path; NaN pad rows must be sliced off
    for n in (128, 3000, 1001):
        xn = make_x(jax.random.fold_in(k3, n), n)
        r, out = fwd(xn, w1, w2)
        jax.block_until_ready((r, out))
        r_ref, out_ref = hack_reference(xn, w1, w2)
        ok &= (r.shape == (n, 1)) and (out.shape == (n, 1))
        ok &= bool(jnp.allclose(out, out_ref, rtol=1e-4, atol=1e-5))
        ok &= bool(jnp.allclose(r, r_ref, rtol=1e-4, atol=1e-5))

    assert ok, "mismatch vs reference"
    print("KERNEL_OK")
</pallas_src>

<mosaic_0001>
module attributes {stable_mosaic.version = 11 : i64} {
  func.func @_hack_kernel(%arg0: i32, %arg1: memref<8x128xf32, #tpu.memory_space<vmem>>, %arg2: memref<128x24xf32, #tpu.memory_space<vmem>>, %arg3: memref<8x16xf32, #tpu.memory_space<vmem>>) attributes {dimension_semantics = [#tpu.dimension_semantics<parallel>], iteration_bounds = array<i64: 2>, scalar_prefetch = 0 : i64, scratch_operands = 0 : i64, tpu.core_type = #tpu.core_type<tc>, window_params = [{transform_indices = @transform_0, window_bounds = array<i64: 8, 128>}, {pipeline_mode = #tpu.pipeline_mode<synchronous>, transform_indices = @transform_1, window_bounds = array<i64: 128, 24>}, {transform_indices = @transform_2, window_bounds = array<i64: 8, 16>}]} {
    %c0 = arith.constant 0 : index
    %c0_0 = arith.constant 0 : index
    %0 = vector.load %arg1[%c0, %c0_0] : memref<8x128xf32, #tpu.memory_space<vmem>>, vector<8x128xf32>
    %c0_1 = arith.constant 0 : index
    %c0_2 = arith.constant 0 : index
    %1 = vector.load %arg2[%c0_1, %c0_2] : memref<128x24xf32, #tpu.memory_space<vmem>>, vector<128x24xf32>
    %cst = arith.constant dense<0.000000e+00> : vector<8x24xf32>
    %2 = tpu.matmul %0, %1, %cst {dimension_numbers = #tpu.dot_dimension_numbers<[1], [0], [0], [1], [0, 0, 1, 1], [], []>} : vector<8x128xf32>, vector<128x24xf32>, vector<8x24xf32> -> vector<8x24xf32>
    %3 = vector.extract_strided_slice %2 {offsets = [0, 0], sizes = [8, 8], strides = [1, 1]} : vector<8x24xf32> to vector<8x8xf32>
    %4 = vector.extract_strided_slice %2 {offsets = [0, 8], sizes = [8, 8], strides = [1, 1]} : vector<8x24xf32> to vector<8x8xf32>
    %5 = vector.extract_strided_slice %2 {offsets = [0, 16], sizes = [8, 8], strides = [1, 1]} : vector<8x24xf32> to vector<8x8xf32>
    %6 = arith.mulf %4, %5 : vector<8x8xf32>
    %7 = arith.addf %3, %6 : vector<8x8xf32>
    %8 = tpu.reciprocal %4 {approx = true} : vector<8x8xf32> -> vector<8x8xf32>
    %9 = arith.mulf %4, %8 : vector<8x8xf32>
    %cst_3 = arith.constant 2.000000e+00 : f32
    %10 = vector.broadcast %cst_3 : f32 to vector<8x8xf32>
    %11 = arith.subf %10, %9 : vector<8x8xf32>
    %12 = arith.mulf %8, %11 : vector<8x8xf32>
    %13 = arith.mulf %3, %3 : vector<8x8xf32>
    %cst_4 = arith.constant -2.500000e-01 : f32
    %14 = vector.broadcast %cst_4 : f32 to vector<8x8xf32>
    %15 = arith.mulf %14, %13 : vector<8x8xf32>
    %16 = arith.mulf %15, %12 : vector<8x8xf32>
    %c0_5 = arith.constant 0 : index
    %c0_6 = arith.constant 0 : index
    %17 = vector.load %arg3[%c0_5, %c0_6] : memref<8x16xf32, #tpu.memory_space<vmem>>, vector<8x8xf32>
    tpu.vector_store %arg3[%c0_5, %c0_6], %16 {strides = array<i32>} : memref<8x16xf32, #tpu.memory_space<vmem>>, vector<8x8xf32>,
    %c0_7 = arith.constant 0 : index
    %c8 = arith.constant 8 : index
    %18 = vector.load %arg3[%c0_7, %c8] : memref<8x16xf32, #tpu.memory_space<vmem>>, vector<8x8xf32>
    tpu.vector_store %arg3[%c0_7, %c8], %7 {strides = array<i32>} : memref<8x16xf32, #tpu.memory_space<vmem>>, vector<8x8xf32>,
    return
  }
  func.func @transform_0(%arg0: i32) -> (i32, i32) {
    %c0_i32 = arith.constant 0 : i32
    %c0_i32_0 = arith.constant 0 : i32
    return %arg0, %c0_i32 : i32, i32
  }
  func.func @transform_1(%arg0: i32) -> (i32, i32) {
    %c0_i32 = arith.constant 0 : i32
    %c0_i32_0 = arith.constant 0 : i32
    %c0_i32_1 = arith.constant 0 : i32
    return %c0_i32, %c0_i32_0 : i32, i32
  }
  func.func @transform_2(%arg0: i32) -> (i32, i32) {
    %c0_i32 = arith.constant 0 : i32
    %c0_i32_0 = arith.constant 0 : i32
    return %arg0, %c0_i32 : i32, i32
  }
}

</mosaic_0001>

<llo_original>
// kernel: hack_forward.1
$region0: #{hack_forward.1}
  #allocation0 [shape = 'u32[]', space=smem, size = 0x4, offset = 0x4, fixed_abs, tag = 'smem constant byte address 0x4 - core index']
  #allocation1 [shape = 'u32[144,128]{1,0:T(1,128)}', space=vmem, size = 0x12000, scoped, tag = 'internal scratch']
  %s0 = inlined_call_operand.vmem [shape: f32[16,128], index: 0, kind: input, shape index: {}]
  %s1 = inlined_call_operand.vmem [shape: f32[128,24], index: 1, kind: input, shape index: {}]
  %s2 = inlined_call_operand.vmem [shape: f32[16,16], index: 2, kind: output, shape index: {}]
  %s3 = sld [smem:[#allocation0]]
  $region41: #{hack_forward.1} parent=0
    _
  %s5 = ssub.s32 1, %s3
  %s6 = scalar_select 0, %s5, %s3
  loop: start=0, step=1, limit=4
  $region2: #{hack_forward.1} parent=0 // loop_pre_header
    _
  $region3: #{hack_forward.1} parent=0 // loop_header
    %s8 = sphi 0, %s12
    %p9 = scmp.ge.s32.totalorder %s8, 4
    %s18 = sphi 0, %s20
    %s21 = sphi 0, %s18
    %s22 = sphi 0, %s21
    %s38 = sphi 0, %s22
    %s42 = sphi 0, %s42
    %s44 = sphi 0, %s42
    %s45 = sphi 0, %s44
    %s59 = sphi 0, %s45
    %s65 = sphi 0, %s67
    %s68 = sphi 0, %s65
    %s69 = sphi 0, %s68
    %s85 = sphi 0, %s69
  $region4: #{hack_forward.1} parent=0 // loop_header_branch
    %11 = sbr.rel (%p9) target = $region8
  $region5: #{hack_forward.1} parent=0 // loop_body
    %s13 = ssub.s32 %s8, 1
    %s14 = ssub.s32 %s8, 2
    %s15 = sadd.s32 %s8, 1
    %s16 = ssub.s32 %s8, %s15
    %p17 = scmp.eq.s32.totalorder %s16, 0
    %s19 = sadd.s32 %s18, 1
    %s20 = scalar_select %p17, %s18, %s19
    %p23 = pneg %p17
    %p24 = scmp.eq.s32.totalorder %s8, 1
    %p25 = por %p23, %p24
    %p26 = scmp.ne.s32.totalorder %s18, %s21
    %p27 = scmp.eq.s32.totalorder %s8, 0
    %p28 = por %p26, %p27
    %p29 = scmp.ne.s32.totalorder %s18, %s21
    %p30 = scmp.eq.s32.totalorder %s13, 1
    %p31 = por %p29, %p30
    %p32 = scmp.ne.s32.totalorder %s21, %s22
    %p33 = scmp.eq.s32.totalorder %s13, 0
    %p34 = por %p32, %p33
    %p35 = scmp.ne.s32.totalorder %s21, %s22
    %p36 = scmp.eq.s32.totalorder %s14, 1
    %p37 = por %p35, %p36
    %p39 = scmp.ne.s32.totalorder %s22, %s38
    %p40 = scmp.eq.s32.totalorder %s14, 0
    %p41 = por %p39, %p40
    %s43 = sadd.s32 %s42, 1
    %p46 = scmp.eq.s32.totalorder %s8, 1
    %p47 = scmp.ne.s32.totalorder %s42, %s44
    %p48 = scmp.eq.s32.totalorder %s8, 0
    %p49 = por %p47, %p48
    %p50 = scmp.ne.s32.totalorder %s42, %s44
    %p51 = scmp.eq.s32.totalorder %s13, 1
    %p52 = por %p50, %p51
    %p53 = scmp.ne.s32.totalorder %s44, %s45
    %p54 = scmp.eq.s32.totalorder %s13, 0
    %p55 = por %p53, %p54
    %p56 = scmp.ne.s32.totalorder %s44, %s45
    %p57 = scmp.eq.s32.totalorder %s14, 1
    %p58 = por %p56, %p57
    %p60 = scmp.ne.s32.totalorder %s45, %s59
    %p61 = scmp.eq.s32.totalorder %s14, 0
    %p62 = por %p60, %p61
    %s63 = ssub.s32 %s8, %s15
    %p64 = scmp.eq.s32.totalorder %s63, 0
    %s66 = sadd.s32 %s65, 1
    %s67 = scalar_select %p64, %s65, %s66
    %p70 = pneg %p64
    %p71 = scmp.eq.s32.totalorder %s8, 1
    %p72 = por %p70, %p71
    %p73 = scmp.ne.s32.totalorder %s65, %s68
    %p74 = scmp.eq.s32.totalorder %s8, 0
    %p75 = por %p73, %p74
    %p76 = scmp.ne.s32.totalorder %s65, %s68
    %p77 = scmp.eq.s32.totalorder %s13, 1
    %p78 = por %p76, %p77
    %p79 = scmp.ne.s32.totalorder %s68, %s69
    %p80 = scmp.eq.s32.totalorder %s13, 0
    %p81 = por %p79, %p80
    %p82 = scmp.ne.s32.totalorder %s68, %s69
    %p83 = scmp.eq.s32.totalorder %s14, 1
    %p84 = por %p82, %p83
    %p86 = scmp.ne.s32.totalorder %s69, %s85
    %p87 = scmp.eq.s32.totalorder %s14, 0
    %p88 = por %p86, %p87
    %p89 = scmp.le.s32.totalorder 1, %s8
    %p90 = scmp.lt.s32.totalorder %s8, 3
    %p91 = pnand %p89, %p90
    %p92 = pneg %p91
    // Predicated region
    $region9: #{hack_forward.1} parent=5 // pred_check
      _
    $region10: #{hack_forward.1} parent=5 // pred_check_branch
      %94 = sbr.rel (%p91) target = $region12
    $region11: #{hack_forward.1} parent=5 // pred_region
      %s95 = ssub.s32 %s8, 1
      // Predicated region
      $region13: #{hack_forward.1} parent=11 // pred_check
        %p96 = pneg %p55
      $region14: #{hack_forward.1} parent=11 // pred_check_branch
        %98 = sbr.rel (%p96) target = $region16
      $region15: #{hack_forward.1} parent=11 // pred_region
        _
      $region16: #{hack_forward.1} parent=11 // pred_fallthru
        _
    $region12: #{hack_forward.1} parent=5 // pred_fallthru
      _
    %p99 = scmp.lt.s32.totalorder %s8, 2
    // Predicated region
    $region17: #{hack_forward.1} parent=5 // pred_check
      %p100 = pneg %p99
    $region18: #{hack_forward.1} parent=5 // pred_check_branch
      %102 = sbr.rel (%p100) target = $region20
    $region19: #{hack_forward.1} parent=5 // pred_region
      // Predicated region
      $region21: #{hack_forward.1} parent=19 // pred_check
        %p103 = pneg %p28
      $region22: #{hack_forward.1} parent=19 // pred_check_branch
        %105 = sbr.rel (%p103) target = $region24
      $region23: #{hack_forward.1} parent=19 // pred_region
        %p106 = scmp.lt.s32.totalorder %s8, 1
        %s107 = scalar_select %p106, %s8, 1
        %s108 = smul.addr %s107, 8
        %s109 = scalar_lea.vmem %s0, %s108
      $region24: #{hack_forward.1} parent=19 // pred_fallthru
        _
    $region20: #{hack_forward.1} parent=5 // pred_fallthru
      _
    %p110 = scmp.le.s32.totalorder 1, %s8
    %p111 = scmp.lt.s32.totalorder %s8, 3
    %p112 = pnand %p110, %p111
    %p113 = pneg %p112
    // Predicated region
    $region25: #{hack_forward.1} parent=5 // pred_check
      _
    $region26: #{hack_forward.1} parent=5 // pred_check_branch
      %115 = sbr.rel (%p112) target = $region28
    $region27: #{hack_forward.1} parent=5 // pred_region
      %s116 = ssub.s32 %s8, 1
      %p117 = scmp.lt.s32.totalorder %s13, 1
      %s118 = scalar_select %p117, %s13, 1
      %s119 = smul.addr %s118, 8
      %s120 = scalar_lea.vmem %s0, %s119
      %p121 = pneg %p34
      %p122 = pneg %p31
      %p123 = pneg %p55
      %p124 = pneg %p52
      %p125 = pneg %p81
      %p126 = pneg %p78
      %p127 = scmp.lt.s32.totalorder %s13, 1
      %s128 = scalar_select %p127, %s13, 1
      %s129 = smul.addr %s128, 8
      %s130 = scalar_lea.vmem %s2, %s129
      %p131 = scmp.lt.s32.totalorder %s13, 1
      %s132 = scalar_select %p131, %s13, 1
      %s133 = smul.addr %s132, 8
      %s134 = scalar_lea.vmem %s0, %s133
      %p135 = scmp.lt.s32.totalorder %s13, 1
      %s136 = scalar_select %p135, %s13, 1
      %s137 = smul.addr %s136, 8
      %s138 = scalar_lea.vmem %s2, %s137
      %v139 = vld [vmem:[%s134] sm:$0xff]
      %v140 = vld [vmem:[%s1] sm:$0xff]
      %v141 = vld [vmem:[%s1 + $0x8] sm:$0xff]
      %v142 = vld [vmem:[%s1 + $0x10] sm:$0xff]
      %v143 = vld [vmem:[%s1 + $0x18] sm:$0xff]
      %v144 = vld [vmem:[%s1 + $0x20] sm:$0xff]
      %v145 = vld [vmem:[%s1 + $0x28] sm:$0xff]
      %v146 = vld [vmem:[%s1 + $0x30] sm:$0xff]
      %v147 = vld [vmem:[%s1 + $0x38] sm:$0xff]
      %v148 = vld [vmem:[%s1 + $0x40] sm:$0xff]
      %v149 = vld [vmem:[%s1 + $0x48] sm:$0xff]
      %v150 = vld [vmem:[%s1 + $0x50] sm:$0xff]
      %v151 = vld [vmem:[%s1 + $0x58] sm:$0xff]
      %v152 = vld [vmem:[%s1 + $0x60] sm:$0xff]
      %v153 = vld [vmem:[%s1 + $0x68] sm:$0xff]
      %v154 = vld [vmem:[%s1 + $0x70] sm:$0xff]
      %v155 = vld [vmem:[%s1 + $0x78] sm:$0xff]
      %156 = vmatprep.subr.mxu0 0.0
      %157 = vmatpush1.msra.mxu0 %v140
      %158 = vmatprep.subr.mxu0 0.0
      %159 = vmatpush1.msra.mxu0 %v141
      %160 = vmatprep.subr.mxu0 0.0
      %161 = vmatpush1.msra.mxu0 %v142
      %162 = vmatprep.subr.mxu0 0.0
      %163 = vmatpush1.msra.mxu0 %v143
      %164 = vmatprep.subr.mxu0 0.0
      %165 = vmatpush1.msra.mxu0 %v144
      %166 = vmatprep.subr.mxu0 0.0
      %167 = vmatpush1.msra.mxu0 %v145
      %168 = vmatprep.subr.mxu0 0.0
      %169 = vmatpush1.msra.mxu0 %v146
      %170 = vmatprep.subr.mxu0 0.0
      %171 = vmatpush1.msra.mxu0 %v147
      %172 = vmatprep.subr.mxu0 0.0
      %173 = vmatpush1.msra.mxu0 %v148
      %174 = vmatprep.subr.mxu0 0.0
      %175 = vmatpush1.msra.mxu0 %v149
      %176 = vmatprep.subr.mxu0 0.0
      %177 = vmatpush1.msra.mxu0 %v150
      %178 = vmatprep.subr.mxu0 0.0
      %179 = vmatpush1.msra.mxu0 %v151
      %180 = vmatprep.subr.mxu0 0.0
      %181 = vmatpush1.msra.mxu0 %v152
      %182 = vmatprep.subr.mxu0 0.0
      %183 = vmatpush1.msra.mxu0 %v153
      %184 = vmatprep.subr.mxu0 0.0
      %185 = vmatpush1.msra.mxu0 %v154
      %186 = vmatprep.subr.mxu0 0.0
      %187 = vmatpush1.msra.mxu0 %v155
      %188 = vmatprep.subr.mxu0 0.0
      %189 = vmatpush1.msra.mxu0 0.0
      %190 = vmatprep.subr.mxu0 0.0
      %191 = vmatpush1.msra.mxu0 0.0
      %192 = vmatprep.subr.mxu0 0.0
      %193 = vmatpush1.msra.mxu0 0.0
      %194 = vmatprep.subr.mxu0 0.0
      %195 = vmatpush1.msra.mxu0 0.0
      %196 = vmatprep.subr.mxu0 0.0
      %197 = vmatpush1.msra.mxu0 0.0
      %198 = vmatprep.subr.mxu0 0.0
      %199 = vmatpush1.msra.mxu0 0.0
      %200 = vmatprep.subr.mxu0 0.0
      %201 = vmatpush1.msra.mxu0 0.0
      %202 = vmatprep.subr.mxu0 0.0
      %203 = vmatpush1.msra.mxu0 0.0
      %204 = vmatprep.subr.mxu0 0.0
      %205 = vmatpush1.msra.mxu0 0.0
      %206 = vmatprep.subr.mxu0 0.0
      %207 = vmatpush1.msra.mxu0 0.0
      %208 = vmatprep.subr.mxu0 0.0
      %209 = vmatpush1.msra.mxu0 0.0
      %210 = vmatprep.subr.mxu0 0.0
      %211 = vmatpush1.msra.mxu0 0.0
      %212 = vmatprep.subr.mxu0 0.0
      %213 = vmatpush1.msra.mxu0 0.0
      %214 = vmatprep.subr.mxu0 0.0
      %215 = vmatpush1.msra.mxu0 0.0
      %216 = vmatprep.subr.mxu0 0.0
      %217 = vmatpush1.msra.mxu0 0.0
      %218 = vmatprep.subr.mxu0 0.0
      %219 = vmatpush1.msra.mxu0 0.0
      %220 = vmatprep.mubr.f32.mxu0 0.0
      %221 = vmatmul.mubr.f32.gmra.mrb[0].mxu0 %v139
      %v222 = vpop.f32.mrb[0].mxu0
      %v223 = vadd.f32 0.0, %v222
      %v224 = vpop.f32.mrb[0].mxu0
      %225 = vdwg.mxu0
      %227 = vrot.lane.b32.xlu0 %v223, 120
      %v228 = vpop.permute.xlu0 %227
      %v230 = vmul.f32 %v223, %v228
      %232 = vrot.lane.b32.xlu0 %v230, 120
      %v233 = vpop.permute.xlu0 %232
      %v235 = vadd.f32 %v223, %v233
      %v236 = vrcp.pop %v223
      %v237 = vmul.f32 %v223, %v236
      %v238 = vsub.f32 2.0, %v237
      %v239 = vmul.f32 %v236, %v238
      %v240 = vmul.f32 %v223, %v223
      %v241 = vmul.f32 %v240, -0.25
      %243 = vrot.lane.b32.xlu0 %v239, 120
      %v244 = vpop.permute.xlu0 %243
      %v246 = vmul.f32 %v241, %v244
      %vm247 = vcmask 64512
      %248 = vst.msk [vmem:[%s138] sm:$0xff] %vm247, %v246
      %250 = vrot.lane.b32.xlu0 %v235, 8
      %v251 = vpop.permute.xlu0 %250
      %vm253 = vcmask 130112
      %254 = vst.msk [vmem:[%s138] sm:$0xff] %vm253, %v251
      %p255 = scmp.lt.s32.totalorder %s13, 1
      %s256 = scalar_select %p255, %s13, 1
      %s257 = smul.addr %s256, 8
      %s258 = scalar_lea.vmem %s2, %s257
      // Predicated region
      $region29: #{hack_forward.1} parent=27 // pred_check
        %p259 = pneg %p78
      $region30: #{hack_forward.1} parent=27 // pred_check_branch
        %261 = sbr.rel (%p259) target = $region32
      $region31: #{hack_forward.1} parent=27 // pred_region
        _
      $region32: #{hack_forward.1} parent=27 // pred_fallthru
        _
    $region28: #{hack_forward.1} parent=5 // pred_fallthru
      _
    %p262 = scmp.le.s32.totalorder 2, %s8
    // Predicated region
    $region33: #{hack_forward.1} parent=5 // pred_check
      %p263 = pneg %p262
    $region34: #{hack_forward.1} parent=5 // pred_check_branch
      %265 = sbr.rel (%p263) target = $region36
    $region35: #{hack_forward.1} parent=5 // pred_region
      %s266 = ssub.s32 %s8, 2
      // Predicated region
      $region37: #{hack_forward.1} parent=35 // pred_check
        %p267 = pneg %p84
      $region38: #{hack_forward.1} parent=35 // pred_check_branch
        %269 = sbr.rel (%p267) target = $region40
      $region39: #{hack_forward.1} parent=35 // pred_region
        %p270 = scmp.lt.s32.totalorder %s14, 1
        %s271 = scalar_select %p270, %s14, 1
        %s272 = smul.addr %s271, 8
        %s273 = scalar_lea.vmem %s2, %s272
      $region40: #{hack_forward.1} parent=35 // pred_fallthru
        _
    $region36: #{hack_forward.1} parent=5 // pred_fallthru
      _
  $region6: #{hack_forward.1} parent=0 // loop_footer
    %s12 = sadd.s32 1, %s8
  $region7: #{hack_forward.1} parent=0 // loop_footer_branch
    %7 = sbr.rel target = $region3
  $region8: #{hack_forward.1} parent=0 // loop_exit
    _

</llo_original>
